<compile_context>
chip_gen: v7x
topology: tpu7x:2x2x1
jax: 0.10.0
libtpu: 0.0.40
codegen_flags: <defaults>
</compile_context>

<pallas_src>
import functools

import jax
import jax.numpy as jnp
from jax import lax
from jax.experimental import pallas as pl
from jax.experimental.pallas import tpu as pltpu

IGNORE_INDEX = -100


# -----------------------------------------------------------------------------
# Fused kernel: streaming CE over row tiles + one-shot cnt MSE, accumulated
# into a single VMEM-resident (8, 128) block (lane 0 = ce_sum, 1 = ce_count,
# 2 = cnt_sse).
# -----------------------------------------------------------------------------
def _rfl_kernel(cnt_pred_ref, cnt_tgt_ref, logits_ref, tgt_ref, acc_ref, *, n_rows):
    i = pl.program_id(0)
    lane = lax.broadcasted_iota(jnp.int32, (8, 128), 1)

    # ---- init accumulator + counting-head SSE, exactly once -----------------
    @pl.when(i == 0)
    def _init():
        diff = cnt_pred_ref[...].astype(jnp.float32) - cnt_tgt_ref[...].astype(jnp.float32)
        cnt_sse = jnp.sum(diff * diff)
        acc_ref[...] = jnp.where(lane == 2, cnt_sse, jnp.float32(0.0))

    # ---- cross-entropy partial over this row tile ---------------------------
    logits = logits_ref[...].astype(jnp.float32)          # (T, C), upcast in-kernel only
    tgt = tgt_ref[...]                                     # (T, 1) int32
    t, c = logits.shape

    # numerically-stable shifted logits; reused for BOTH lse and the gather
    row_max = jnp.max(logits, axis=-1, keepdims=True)
    shifted = logits - row_max
    lse = jnp.log(jnp.sum(jnp.exp(shifted), axis=-1, keepdims=True))       # (T, 1)

    # gather shifted logit at the target index via one-hot compare (no x-lane gather)
    col = lax.broadcasted_iota(jnp.int32, (t, c), 1)
    picked = jnp.sum(jnp.where(col == tgt, shifted, 0.0), axis=-1, keepdims=True)

    # rows beyond the real array (ragged last tile) are masked out
    row = i * t + lax.broadcasted_iota(jnp.int32, (t, 1), 0)
    valid = jnp.logical_and(tgt != IGNORE_INDEX, row < n_rows)             # (T, 1)

    ce_sum = jnp.sum(jnp.where(valid, lse - picked, 0.0))
    ce_cnt = jnp.sum(valid.astype(jnp.float32))

    acc_ref[...] += jnp.where(lane == 0, ce_sum,
                              jnp.where(lane == 1, ce_cnt, jnp.float32(0.0)))


# -----------------------------------------------------------------------------
# Wrapper helpers
# -----------------------------------------------------------------------------
def _as_2d(x):
    # contiguous reshapes only -> no HBM copy
    if x.ndim == 0:
        return x.reshape(1, 1)
    if x.ndim == 1:
        return x.reshape(1, x.shape[0])
    return x.reshape(-1, x.shape[-1])


def _vmem_cap_bytes():
    """Generation-aware usable-VMEM ceiling (per TensorCore)."""
    try:
        kind = jax.devices()[0].device_kind.lower()
    except Exception:
        kind = ""
    if ("v5" in kind) or ("v6" in kind):
        return 80 * 1024 * 1024          # 128 MiB physical on v5e/v6e -> generous cap
    return 48 * 1024 * 1024              # safe on v7x (64 MiB per TC) and unknown parts


def _plan_tiles(n_rows, n_classes, itemsize, tile_override=None):
    """Pick the row-tile size and a matching vmem_limit_bytes.

    Per-row VMEM footprint of one pipeline stage:
      logits input buffer : C * itemsize       (x2, double-buffered)
      target input buffer : 512 B              (x2; a (T,1) int32 block pads to 128 lanes)
      f32 elementwise temporaries (upcast/shift/exp/one-hot select): ~4 * C * 4
    """
    cap = _vmem_cap_bytes()
    per_row = 2 * n_classes * itemsize + 2 * 512 + 4 * n_classes * 4

    if tile_override is not None:
        t = max(8, (int(tile_override) // 8) * 8)
    else:
        usable = (cap * 7) // 10
        t = max(8, (int(usable // per_row) // 8) * 8)
        n_rnd = ((n_rows + 7) // 8) * 8
        if n_rnd <= t:
            t = n_rnd                                      # whole problem in one resident tile
        else:
            # keep >= ~4 grid steps so the input DMA stays overlapped with compute
            t = min(t, max(8, ((pl.cdiv(n_rnd, 4) + 7) // 8) * 8))

    vmem_limit = int(min(cap, max(per_row * t + (2 << 20), 16 << 20)))
    return int(t), vmem_limit


def _rfl_partials(cnt_pred, cnt_tgt, logits, targets, tile_rows=None):
    """Returns (ce_sum, ce_count, cnt_sse) as f32 scalars."""
    n, c = logits.shape
    itemsize = jnp.dtype(logits.dtype).itemsize
    tile_n, vmem_limit = _plan_tiles(n, c, itemsize, tile_override=tile_rows)
    num_tiles = int(pl.cdiv(n, tile_n))

    kernel = functools.partial(_rfl_kernel, n_rows=n)

    cost = pl.CostEstimate(
        flops=int(6 * n * c + 3 * cnt_pred.size),
        transcendentals=int(n * c),
        bytes_accessed=int(n * c * itemsize + n * 4
                           + 2 * cnt_pred.size * jnp.dtype(cnt_pred.dtype).itemsize
                           + 8 * 128 * 4),
    )

    acc = pl.pallas_call(
        kernel,
        out_shape=jax.ShapeDtypeStruct((8, 128), jnp.float32),
        grid=(num_tiles,),
        in_specs=[
            pl.BlockSpec(cnt_pred.shape, lambda i: (0, 0)),   # tiny, VMEM-resident
            pl.BlockSpec(cnt_tgt.shape, lambda i: (0, 0)),
            pl.BlockSpec((tile_n, c), lambda i: (i, 0)),      # row-tiled logits (streamed)
            pl.BlockSpec((tile_n, 1), lambda i: (i, 0)),      # row-tiled targets
        ],
        # resident accumulator: same block every step, written back to HBM once
        out_specs=pl.BlockSpec((8, 128), lambda i: (0, 0)),
        compiler_params=pltpu.CompilerParams(
            dimension_semantics=("arbitrary",),
            vmem_limit_bytes=vmem_limit,
        ),
        cost_estimate=cost,
    )(cnt_pred, cnt_tgt, logits, targets)

    return acc[0, 0], acc[0, 1], acc[0, 2]


# -----------------------------------------------------------------------------
# RFLLoss forward
# -----------------------------------------------------------------------------
def rfl_loss(predicts, batch, ignore_index=IGNORE_INDEX, tile_rows=None):
    assert ignore_index == IGNORE_INDEX  # kernel is specialized to -100

    if isinstance(predicts, (tuple, list)):
        cnt_outputs, seq_outputs = predicts
    else:
        cnt_outputs, seq_outputs = predicts, None

    # ---- counting head inputs (tiny) ----------------------------------------
    if cnt_outputs is not None:
        cnt_pred = _as_2d(cnt_outputs)                     # native dtype, cast in-kernel
        cnt_tgt = _as_2d(batch[3])
        cnt_size = int(cnt_pred.size)
    else:
        cnt_pred = jnp.zeros((8, 128), jnp.float32)        # dummy (contributes 0)
        cnt_tgt = jnp.zeros((8, 128), jnp.float32)
        cnt_size = 1

    # ---- sequence head inputs ------------------------------------------------
    if seq_outputs is not None:
        labels = batch[1].astype(jnp.int32)
        _ = batch[2]  # label lengths: cast-only in the reference forward, unused
        assert labels.ndim == seq_outputs.ndim - 1
        bsz, num_steps, num_classes = seq_outputs.shape
        # Emulate seq[:, :-1, :] vs labels[:, 1:] WITHOUT copying the logits:
        # shift targets left by one and mark the last step of every sequence as
        # ignore_index, then feed the full contiguous (B*S, C) logits view.
        tgt = jnp.concatenate(
            [labels[:, 1:], jnp.full((bsz, 1), IGNORE_INDEX, jnp.int32)], axis=1)
        logits2d = seq_outputs.reshape(bsz * num_steps, num_classes)  # free reshape
        tgt2d = tgt.reshape(bsz * num_steps, 1)
    else:
        logits2d = jnp.zeros((8, 128), jnp.float32)        # dummy (all rows ignored)
        tgt2d = jnp.full((8, 1), IGNORE_INDEX, jnp.int32)

    ce_sum, ce_cnt, cnt_sse = _rfl_partials(cnt_pred, cnt_tgt, logits2d, tgt2d,
                                            tile_rows=tile_rows)

    total_loss = {}
    loss = jnp.float32(0.0)
    if cnt_outputs is not None:
        cnt_l = cnt_sse / jnp.float32(cnt_size)
        total_loss["cnt_loss"] = cnt_l
        loss = loss + cnt_l
    if seq_outputs is not None:
        seq_l = ce_sum / ce_cnt                            # NaN if no valid rows (matches torch)
        total_loss["seq_loss"] = seq_l
        loss = loss + seq_l
    total_loss["loss"] = loss
    return total_loss


# -----------------------------------------------------------------------------
# Demo / smoke test
# -----------------------------------------------------------------------------
def _ref_losses(cnt_outputs, seq_outputs, labels, cnt_targets):
    # plain-JAX mirror of the torch module
    ref_cnt = jnp.mean((cnt_outputs.astype(jnp.float32)
                        - cnt_targets.astype(jnp.float32)) ** 2)
    num_classes = seq_outputs.shape[-1]
    lg = seq_outputs[:, :-1, :].reshape(-1, num_classes).astype(jnp.float32)
    tg = labels[:, 1:].reshape(-1)
    logp = jax.nn.log_softmax(lg, axis=-1)
    valid = tg != IGNORE_INDEX
    safe_tg = jnp.where(valid, tg, 0)
    row_loss = -jnp.take_along_axis(logp, safe_tg[:, None], axis=-1)[:, 0]
    ref_seq = jnp.sum(jnp.where(valid, row_loss, 0.0)) / jnp.sum(valid)
    return ref_cnt, ref_seq


def _check(out, cnt_outputs, seq_outputs, labels, cnt_targets):
    ref_cnt, ref_seq = _ref_losses(cnt_outputs, seq_outputs, labels, cnt_targets)
    assert jnp.allclose(out["cnt_loss"], ref_cnt, atol=1e-5, rtol=1e-5)
    assert jnp.allclose(out["seq_loss"], ref_seq, atol=1e-5, rtol=1e-5)
    assert jnp.allclose(out["loss"], ref_cnt + ref_seq, atol=1e-5, rtol=1e-5)


if __name__ == "__main__":
    key = jax.random.PRNGKey(0)

    # ---- config A: default tiling (single resident tile) --------------------
    k1, k2, k3, k4, key = jax.random.split(key, 5)
    B, num_steps, num_classes, cnt_dim = 2, 8, 32, 32
    cnt_outputs = jax.random.normal(k1, (B, cnt_dim), dtype=jnp.float32)
    seq_outputs = jax.random.normal(k2, (B, num_steps, num_classes), dtype=jnp.float32)
    labels = jax.random.randint(k3, (B, num_steps), 0, num_classes, dtype=jnp.int32)
    labels = labels.at[0, -1].set(IGNORE_INDEX)            # exercise ignore_index path
    label_lengths = jnp.full((B,), num_steps, dtype=jnp.int32)
    cnt_targets = jax.random.normal(k4, (B, cnt_dim), dtype=jnp.float32)
    batch = [None, labels, label_lengths, cnt_targets]

    out = rfl_loss((cnt_outputs, seq_outputs), batch)
    out = {k: jax.block_until_ready(v) for k, v in out.items()}
    _check(out, cnt_outputs, seq_outputs, labels, cnt_targets)

    # ---- config B: multi-tile grid with a ragged last tile ------------------
    k1, k2, k3, k4, key = jax.random.split(key, 5)
    B, num_steps, num_classes, cnt_dim = 3, 9, 40, 24
    cnt_outputs = jax.random.normal(k1, (B, cnt_dim), dtype=jnp.float32)
    seq_outputs = jax.random.normal(k2, (B, num_steps, num_classes), dtype=jnp.float32)
    labels = jax.random.randint(k3, (B, num_steps), 0, num_classes, dtype=jnp.int32)
    labels = labels.at[1, 3].set(IGNORE_INDEX)             # mid-sequence ignore
    label_lengths = jnp.full((B,), num_steps, dtype=jnp.int32)
    cnt_targets = jax.random.normal(k4, (B, cnt_dim), dtype=jnp.float32)
    batch = [None, labels, label_lengths, cnt_targets]

    # tile_rows=8 forces 4 grid steps over 27 rows -> exercises in-kernel
    # accumulation and the masked ragged last tile.
    out = rfl_loss((cnt_outputs, seq_outputs), batch, tile_rows=8)
    out = {k: jax.block_until_ready(v) for k, v in out.items()}
    _check(out, cnt_outputs, seq_outputs, labels, cnt_targets)

    print("KERNEL_OK")
</pallas_src>

<mosaic_0001>
module attributes {stable_mosaic.version = 11 : i64} {
  func.func @_rfl_kernel(%arg0: i32, %arg1: memref<2x32xf32, #tpu.memory_space<vmem>>, %arg2: memref<2x32xf32, #tpu.memory_space<vmem>>, %arg3: memref<16x32xf32, #tpu.memory_space<vmem>>, %arg4: memref<16x1xi32, #tpu.memory_space<vmem>>, %arg5: memref<8x128xf32, #tpu.memory_space<vmem>>) attributes {dimension_semantics = [#tpu.dimension_semantics<arbitrary>], iteration_bounds = array<i64: 1>, scalar_prefetch = 0 : i64, scratch_operands = 0 : i64, tpu.core_type = #tpu.core_type<tc>, window_params = [{pipeline_mode = #tpu.pipeline_mode<synchronous>, transform_indices = @transform_0, window_bounds = array<i64: 2, 32>}, {pipeline_mode = #tpu.pipeline_mode<synchronous>, transform_indices = @transform_1, window_bounds = array<i64: 2, 32>}, {transform_indices = @transform_2, window_bounds = array<i64: 16, 32>}, {transform_indices = @transform_3, window_bounds = array<i64: 16, 1>}, {pipeline_mode = #tpu.pipeline_mode<synchronous>, transform_indices = @transform_4, window_bounds = array<i64: 8, 128>}]} {
    %0 = tpu.iota {dimensions = array<i32: 1>} : vector<8x128xi32>
    %c0_i32 = arith.constant 0 : i32
    %1 = arith.cmpi eq, %arg0, %c0_i32 : i32
    %2 = arith.extui %1 : i1 to i32
    %c0_i32_0 = arith.constant 0 : i32
    %3 = arith.cmpi ne, %2, %c0_i32_0 : i32
    scf.if %3 {
      %c0_17 = arith.constant 0 : index
      %c0_18 = arith.constant 0 : index
      %55 = vector.load %arg1[%c0_17, %c0_18] : memref<2x32xf32, #tpu.memory_space<vmem>>, vector<2x32xf32>
      %c0_19 = arith.constant 0 : index
      %c0_20 = arith.constant 0 : index
      %56 = vector.load %arg2[%c0_19, %c0_20] : memref<2x32xf32, #tpu.memory_space<vmem>>, vector<2x32xf32>
      %57 = arith.subf %55, %56 : vector<2x32xf32>
      %58 = arith.mulf %57, %57 : vector<2x32xf32>
      %59 = vector.shape_cast %58 : vector<2x32xf32> to vector<1x2x32xf32>
      %cst_21 = arith.constant dense<0.000000e+00> : vector<1xf32>
      %60 = vector.multi_reduction <add>, %59, %cst_21 [1, 2] : vector<1x2x32xf32> to vector<1xf32>
      %61 = vector.shape_cast %60 : vector<1xf32> to vector<1x1x1xf32>
      %62 = vector.extract %61[0, 0, 0] : f32 from vector<1x1x1xf32>
      %c2_i32 = arith.constant 2 : i32
      %63 = vector.broadcast %c2_i32 : i32 to vector<8x128xi32>
      %64 = arith.cmpi eq, %0, %63 : vector<8x128xi32>
      %cst_22 = arith.constant 0.000000e+00 : f32
      %65 = vector.broadcast %62 : f32 to vector<8x128xf32>
      %66 = vector.broadcast %cst_22 : f32 to vector<8x128xf32>
      %67 = arith.select %64, %65, %66 : vector<8x128xi1>, vector<8x128xf32>
      %c0_23 = arith.constant 0 : index
      %c0_24 = arith.constant 0 : index
      %68 = vector.load %arg5[%c0_23, %c0_24] : memref<8x128xf32, #tpu.memory_space<vmem>>, vector<8x128xf32>
      tpu.vector_store %arg5[%c0_23, %c0_24], %67 {strides = array<i32>} : memref<8x128xf32, #tpu.memory_space<vmem>>, vector<8x128xf32>,
    } else {
    }
    %c0 = arith.constant 0 : index
    %c0_1 = arith.constant 0 : index
    %4 = vector.load %arg3[%c0, %c0_1] : memref<16x32xf32, #tpu.memory_space<vmem>>, vector<16x32xf32>
    %c0_2 = arith.constant 0 : index
    %c0_3 = arith.constant 0 : index
    %5 = vector.load %arg4[%c0_2, %c0_3] : memref<16x1xi32, #tpu.memory_space<vmem>>, vector<16x1xi32>
    %cst = arith.constant dense<0xFF800000> : vector<16xf32>
    %6 = vector.multi_reduction <maximumf>, %4, %cst [1] : vector<16x32xf32> to vector<16xf32>
    %7 = vector.shape_cast %6 : vector<16xf32> to vector<16x1xf32>
    %8 = vector.broadcast %7 : vector<16x1xf32> to vector<16x32xf32>
    %9 = arith.subf %4, %8 : vector<16x32xf32>
    %10 = math.exp %9 : vector<16x32xf32>
    %cst_4 = arith.constant dense<0.000000e+00> : vector<16xf32>
    %11 = vector.multi_reduction <add>, %10, %cst_4 [1] : vector<16x32xf32> to vector<16xf32>
    %12 = vector.shape_cast %11 : vector<16xf32> to vector<16x1xf32>
    %13 = math.log %12 : vector<16x1xf32>
    %14 = tpu.iota {dimensions = array<i32: 1>} : vector<16x32xi32>
    %15 = vector.broadcast %5 : vector<16x1xi32> to vector<16x32xi32>
    %16 = arith.cmpi eq, %14, %15 : vector<16x32xi32>
    %cst_5 = arith.constant 0.000000e+00 : f32
    %17 = vector.broadcast %cst_5 : f32 to vector<16x32xf32>
    %18 = arith.select %16, %9, %17 : vector<16x32xi1>, vector<16x32xf32>
    %cst_6 = arith.constant dense<0.000000e+00> : vector<16xf32>
    %19 = vector.multi_reduction <add>, %18, %cst_6 [1] : vector<16x32xf32> to vector<16xf32>
    %20 = vector.shape_cast %19 : vector<16xf32> to vector<16x1xf32>
    %c16_i32 = arith.constant 16 : i32
    %21 = arith.muli %arg0, %c16_i32 : i32
    %22 = tpu.iota {dimensions = array<i32: 0>} : vector<16x1xi32>
    %23 = vector.broadcast %21 : i32 to vector<16x1xi32>
    %24 = arith.addi %23, %22 : vector<16x1xi32>
    %c-100_i32 = arith.constant -100 : i32
    %25 = vector.broadcast %c-100_i32 : i32 to vector<16x1xi32>
    %26 = arith.cmpi ne, %5, %25 : vector<16x1xi32>
    %c16_i32_7 = arith.constant 16 : i32
    %27 = vector.broadcast %c16_i32_7 : i32 to vector<16x1xi32>
    %28 = arith.cmpi slt, %24, %27 : vector<16x1xi32>
    %29 = arith.andi %26, %28 : vector<16x1xi1>
    %30 = arith.subf %13, %20 : vector<16x1xf32>
    %cst_8 = arith.constant 0.000000e+00 : f32
    %31 = vector.broadcast %cst_8 : f32 to vector<16x1xf32>
    %32 = arith.select %29, %30, %31 : vector<16x1xi1>, vector<16x1xf32>
    %33 = vector.shape_cast %32 : vector<16x1xf32> to vector<1x16x1xf32>
    %cst_9 = arith.constant dense<0.000000e+00> : vector<1xf32>
    %34 = vector.multi_reduction <add>, %33, %cst_9 [1, 2] : vector<1x16x1xf32> to vector<1xf32>
    %35 = vector.shape_cast %34 : vector<1xf32> to vector<1x1x1xf32>
    %36 = vector.extract %35[0, 0, 0] : f32 from vector<1x1x1xf32>
    %37 = arith.extui %29 : vector<16x1xi1> to vector<16x1xi32>
    %38 = arith.sitofp %37 : vector<16x1xi32> to vector<16x1xf32>
    %39 = vector.shape_cast %38 : vector<16x1xf32> to vector<1x16x1xf32>
    %cst_10 = arith.constant dense<0.000000e+00> : vector<1xf32>
    %40 = vector.multi_reduction <add>, %39, %cst_10 [1, 2] : vector<1x16x1xf32> to vector<1xf32>
    %41 = vector.shape_cast %40 : vector<1xf32> to vector<1x1x1xf32>
    %42 = vector.extract %41[0, 0, 0] : f32 from vector<1x1x1xf32>
    %c0_11 = arith.constant 0 : index
    %c0_12 = arith.constant 0 : index
    %43 = vector.load %arg5[%c0_11, %c0_12] : memref<8x128xf32, #tpu.memory_space<vmem>>, vector<8x128xf32>
    %c0_i32_13 = arith.constant 0 : i32
    %44 = vector.broadcast %c0_i32_13 : i32 to vector<8x128xi32>
    %45 = arith.cmpi eq, %0, %44 : vector<8x128xi32>
    %c1_i32 = arith.constant 1 : i32
    %46 = vector.broadcast %c1_i32 : i32 to vector<8x128xi32>
    %47 = arith.cmpi eq, %0, %46 : vector<8x128xi32>
    %cst_14 = arith.constant 0.000000e+00 : f32
    %48 = vector.broadcast %42 : f32 to vector<8x128xf32>
    %49 = vector.broadcast %cst_14 : f32 to vector<8x128xf32>
    %50 = arith.select %47, %48, %49 : vector<8x128xi1>, vector<8x128xf32>
    %51 = vector.broadcast %36 : f32 to vector<8x128xf32>
    %52 = arith.select %45, %51, %50 : vector<8x128xi1>, vector<8x128xf32>
    %53 = arith.addf %43, %52 : vector<8x128xf32>
    %c0_15 = arith.constant 0 : index
    %c0_16 = arith.constant 0 : index
    %54 = vector.load %arg5[%c0_15, %c0_16] : memref<8x128xf32, #tpu.memory_space<vmem>>, vector<8x128xf32>
    tpu.vector_store %arg5[%c0_15, %c0_16], %53 {strides = array<i32>} : memref<8x128xf32, #tpu.memory_space<vmem>>, vector<8x128xf32>,
    return
  }
  func.func @transform_0(%arg0: i32) -> (i32, i32) {
    %c0_i32 = arith.constant 0 : i32
    %c0_i32_0 = arith.constant 0 : i32
    %c0_i32_1 = arith.constant 0 : i32
    return %c0_i32, %c0_i32_0 : i32, i32
  }
  func.func @transform_1(%arg0: i32) -> (i32, i32) {
    %c0_i32 = arith.constant 0 : i32
    %c0_i32_0 = arith.constant 0 : i32
    %c0_i32_1 = arith.constant 0 : i32
    return %c0_i32, %c0_i32_0 : i32, i32
  }
  func.func @transform_2(%arg0: i32) -> (i32, i32) {
    %c0_i32 = arith.constant 0 : i32
    %c0_i32_0 = arith.constant 0 : i32
    return %arg0, %c0_i32 : i32, i32
  }
  func.func @transform_3(%arg0: i32) -> (i32, i32) {
    %c0_i32 = arith.constant 0 : i32
    %c0_i32_0 = arith.constant 0 : i32
    return %arg0, %c0_i32 : i32, i32
  }
  func.func @transform_4(%arg0: i32) -> (i32, i32) {
    %c0_i32 = arith.constant 0 : i32
    %c0_i32_0 = arith.constant 0 : i32
    %c0_i32_1 = arith.constant 0 : i32
    return %c0_i32, %c0_i32_0 : i32, i32
  }
}

</mosaic_0001>

<llo_original>
// kernel: tpu_custom_call.1
$region0: #{tpu_custom_call.1}
  #allocation0 [shape = 'u32[]', space=smem, size = 0x4, offset = 0x4, fixed_abs, tag = 'smem constant byte address 0x4 - core index']
  #allocation1 [shape = 'u32[144,128]{1,0:T(1,128)}', space=vmem, size = 0x12000, scoped, tag = 'internal scratch']
  %s0 = inlined_call_operand.vmem [shape: f32[2,32], index: 0, kind: input, shape index: {}]
  %s1 = inlined_call_operand.vmem [shape: f32[2,32], index: 1, kind: input, shape index: {}]
  %s2 = inlined_call_operand.vmem [shape: f32[16,32], index: 2, kind: input, shape index: {}]
  %s3 = inlined_call_operand.vmem [shape: s32[16,1], index: 3, kind: input, shape index: {}]
  %s4 = inlined_call_operand.hbm [shape: f32[8,128], index: 4, kind: output, shape index: {}]
  %s5 = sld [smem:[#allocation0]]
  $region30: #{tpu_custom_call.1} parent=0
    _
  %s7 = ssub.s32 1, %s5
  %s8 = scalar_select 0, %s7, %s5
  $region1: #{tpu_custom_call.1} parent=0
    #allocation2 [shape = 'u8[4096]{0}', space=vmem, size = 0x1000, scoped, tag = 'output window, operand 0, single buffered']
    #allocation3 [shape = 's32[1]{0}', space=sflag, size = 0x4, scoped, tag = 'scoped memory for tpu_custom_call.1']
    %9 = vsyncpa [#allocation3], 0
    // Predicated region
    $region2: #{tpu_custom_call.1} parent=1 // pred_check
      _
    $region3: #{tpu_custom_call.1} parent=1 // pred_check_branch
      %11 = sbr.rel (0) target = $region5
    $region4: #{tpu_custom_call.1} parent=1 // pred_region
      _
    $region5: #{tpu_custom_call.1} parent=1 // pred_fallthru
      _
    // Predicated region
    $region6: #{tpu_custom_call.1} parent=1 // pred_check
      _
    $region7: #{tpu_custom_call.1} parent=1 // pred_check_branch
      %13 = sbr.rel (0) target = $region9
    $region8: #{tpu_custom_call.1} parent=1 // pred_region
      _
    $region9: #{tpu_custom_call.1} parent=1 // pred_fallthru
      _
    // Predicated region
    $region10: #{tpu_custom_call.1} parent=1 // pred_check
      _
    $region11: #{tpu_custom_call.1} parent=1 // pred_check_branch
      %15 = sbr.rel (0) target = $region13
    $region12: #{tpu_custom_call.1} parent=1 // pred_region
      _
    $region13: #{tpu_custom_call.1} parent=1 // pred_fallthru
      _
    // Predicated region
    $region14: #{tpu_custom_call.1} parent=1 // pred_check
      _
    $region15: #{tpu_custom_call.1} parent=1 // pred_check_branch
      %17 = sbr.rel (0) target = $region17
    $region16: #{tpu_custom_call.1} parent=1 // pred_region
      _
    $region17: #{tpu_custom_call.1} parent=1 // pred_fallthru
      _
    %v18 = vlaneseq
    %v19 = vand.u32 %v18, 127
    %p20 = scmp.eq.s32.totalorder 0, 0
    // Predicated region
    $region18: #{tpu_custom_call.1} parent=1 // pred_check
      %p21 = pneg %p20
    $region19: #{tpu_custom_call.1} parent=1 // pred_check_branch
      %23 = sbr.rel (%p21) target = $region21
    $region20: #{tpu_custom_call.1} parent=1 // pred_region
      %v24 = vld [vmem:[%s0] sm:$0x3]
      %v25 = vld [vmem:[%s1] sm:$0x3]
      %v26 = vsub.f32 %v24, %v25
      %v27 = vmul.f32 %v26, %v26
      %vm28 = vcmask 254976
      %v29 = vsel %vm28, %v27, 0.0
      %30 = vadd.xlane.f32.xlu0 %v29
      %v31 = vpop.xlane.xlu0 %30
      %v32 = vrot.slane %v31, 4
      %v33 = vadd.f32 %v31, %v32
      %v34 = vrot.slane %v33, 2
      %v35 = vadd.f32 %v33, %v34
      %v36 = vrot.slane %v35, 1
      %v37 = vadd.f32 %v35, %v36
      %s38 = vtos %v37
      %vm39 = vcmp.eq.s32.totalorder %v19, 2
      %v40 = vstv %s38
      %v41 = vsel %vm39, %v40, 0.0
      %42 = vst [vmem:[#allocation2] sm:$0xff] %v41
    $region21: #{tpu_custom_call.1} parent=1 // pred_fallthru
      _
    %v43 = vld [vmem:[%s2] sm:$0xff]
    %v44 = vld [vmem:[%s2 + $0x8] sm:$0xff]
    %v45 = vld [vmem:[%s3] sm:$0xff]
    %v46 = vld [vmem:[%s3 + $0x8] sm:$0xff]
    %vm47 = vcmask 261120
    %v48 = vsel %vm47, %v43, -inf
    %49 = vmax.xlane.f32.xlu0 %v48
    %v50 = vpop.xlane.xlu0 %49
    %v51 = vsel %vm47, %v44, -inf
    %52 = vmax.xlane.f32.xlu0 %v51
    %v53 = vpop.xlane.xlu0 %52
    %v54 = vsub.f32 %v43, %v50
    %v55 = vsub.f32 %v44, %v53
    %v56 = vmul.f32 %v54, 1.442695
    %v57 = vpow.pop %v56
    %v58 = vmul.f32 %v55, 1.442695
    %v59 = vpow.pop %v58
    %v60 = vsel %vm47, %v57, 0.0
    %61 = vadd.xlane.f32.xlu0 %v60
    %v62 = vpop.xlane.xlu0 %61
    %v63 = vsel %vm47, %v59, 0.0
    %64 = vadd.xlane.f32.xlu0 %v63
    %v65 = vpop.xlane.xlu0 %64
    %v66 = vlog2.pop %v62
    %v67 = vmul.f32 %v66, 0.6931472
    %v68 = vlog2.pop %v65
    %v69 = vmul.f32 %v68, 0.6931472
    %70 = vset.pattern.permute.xlu0 0
    %71 = vperm.xlu0 %70, %v45
    %v72 = vpop.permute.xlu0 %71
    %73 = vset.pattern.permute.xlu0 0
    %74 = vperm.xlu0 %73, %v46
    %v75 = vpop.permute.xlu0 %74
    %vm76 = vcmp.eq.s32.totalorder %v19, %v72
    %vm77 = vcmp.eq.s32.totalorder %v19, %v75
    %v78 = vsel %vm76, %v54, 0.0
    %v79 = vsel %vm77, %v55, 0.0
    %v80 = vsel %vm47, %v78, 0.0
    %81 = vadd.xlane.f32.xlu0 %v80
    %v82 = vpop.xlane.xlu0 %81
    %v83 = vsel %vm47, %v79, 0.0
    %84 = vadd.xlane.f32.xlu0 %v83
    %v85 = vpop.xlane.xlu0 %84
    %s86 = smul.u32 0, 16
    %v87 = vlaneseq
    %v88 = vshrl.u32 %v87, 7
    %v89 = vadd.s32 %v88, 8
    %v90 = vstv %s86
    %v91 = vadd.s32 %v90, %v88
    %v92 = vadd.s32 %v90, %v89
    %vm93 = vcmp.ne.s32.totalorder %v45, 4294967196
    %vm94 = vcmp.ne.s32.totalorder %v46, 4294967196
    %vm95 = vcmp.lt.s32.totalorder %v91, 16
    %vm96 = vcmp.lt.s32.totalorder %v92, 16
    %vm97 = vmand %vm93, %vm95
    %vm98 = vmand %vm94, %vm96
    %v99 = vsub.f32 %v67, %v82
    %v100 = vsub.f32 %v69, %v85
    %v101 = vsel %vm97, %v99, 0.0
    %v102 = vsel %vm98, %v100, 0.0
    %vm103 = vcmask 7168
    %v104 = vsel %vm103, %v101, 0.0
    %v105 = vsel %vm103, %v102, 0.0
    %v106 = vadd.f32 %v104, %v105
    %107 = vadd.xlane.f32.xlu0 %v106
    %v108 = vpop.xlane.xlu0 %107
    %v109 = vrot.slane %v108, 4
    %v110 = vadd.f32 %v108, %v109
    %v111 = vrot.slane %v110, 2
    %v112 = vadd.f32 %v110, %v111
    %v113 = vrot.slane %v112, 1
    %v114 = vadd.f32 %v112, %v113
    %s115 = vtos %v114
    %v116 = vsel %vm97, 1, 0
    %v117 = vsel %vm98, 1, 0
    %v118 = vcvt.s32.f32 %v116
    %v119 = vcvt.s32.f32 %v117
    %v120 = vsel %vm103, %v118, 0.0
    %v121 = vsel %vm103, %v119, 0.0
    %v122 = vadd.f32 %v120, %v121
    %123 = vadd.xlane.f32.xlu0 %v122
    %v124 = vpop.xlane.xlu0 %123
    %v125 = vrot.slane %v124, 4
    %v126 = vadd.f32 %v124, %v125
    %v127 = vrot.slane %v126, 2
    %v128 = vadd.f32 %v126, %v127
    %v129 = vrot.slane %v128, 1
    %v130 = vadd.f32 %v128, %v129
    %s131 = vtos %v130
    %v132 = vld [vmem:[#allocation2] sm:$0xff]
    %vm133 = vcmp.eq.s32.totalorder %v19, 0
    %vm134 = vcmp.eq.s32.totalorder %v19, 1
    %v135 = vstv %s131
    %v136 = vsel %vm134, %v135, 0.0
    %v137 = vstv %s115
    %v138 = vsel %vm133, %v137, %v136
    %v139 = vadd.f32 %v132, %v138
    %140 = vst [vmem:[#allocation2] sm:$0xff] %v139
    // Predicated region
    $region22: #{tpu_custom_call.1} parent=1 // pred_check
      _
    $region23: #{tpu_custom_call.1} parent=1 // pred_check_branch
      %142 = sbr.rel (0) target = $region25
    $region24: #{tpu_custom_call.1} parent=1 // pred_region
      %s144 = ssub.s32 128, 128
      %145 = vsyncadd [#allocation3], %s144
      %s147 = sshll.u32 [#allocation2], 4
      %s148 = int_to_ptr.vmem [resolvable:$true] %s147
      %150 = dma.vmem_to_hbm [thread:$0]  %s148, 128, %s4, [#allocation3]
    $region25: #{tpu_custom_call.1} parent=1 // pred_fallthru
      _
    // Predicated region
    $region26: #{tpu_custom_call.1} parent=1 // pred_check
      _
    $region27: #{tpu_custom_call.1} parent=1 // pred_check_branch
      %152 = sbr.rel (0) target = $region29
    $region28: #{tpu_custom_call.1} parent=1 // pred_region
      %153 = dma.done [#allocation3], 128
    $region29: #{tpu_custom_call.1} parent=1 // pred_fallthru
      _
    %154 = vsyncpa [#allocation3], 1

</llo_original>
